<compile_context>
chip_gen: v7x
topology: tpu7x:2x2x1
jax: 0.10.0
libtpu: 0.0.40
codegen_flags: <defaults>
</compile_context>

<pallas_src>
import functools

import numpy as np

import jax
import jax.numpy as jnp
from jax.experimental import pallas as pl
from jax.experimental.pallas import tpu as pltpu


# ------------------------------ helpers ------------------------------------ #
def _round_up(x, m):
    return ((x + m - 1) // m) * m


def _pick_tile(dim, cap):
    """Largest tile <= cap that divides dim and is a multiple of 128, else full dim."""
    if dim <= cap:
        return dim
    cap = max(int(cap), 128)
    start = cap - (cap % 128)
    for t in range(start, 127, -128):
        if dim % t == 0:
            return t
    return dim  # fallback: full (already lane-aligned or small) dim


def _vmem_capacity_bytes():
    try:
        return int(pltpu.get_tpu_info().vmem_capacity_bytes)
    except Exception:
        return 64 * 1024 * 1024  # conservative default (v7x per-TC VMEM)


# ----------------------- fused MLP (Linear->Tanh->Linear) ------------------- #
def _fused_mlp_kernel(x_ref, w1_ref, b1_ref, w2_ref, b2_ref, o_ref, acc_ref):
    j = pl.program_id(1)  # hidden-axis tile: N of linear-1, K-reduction of linear-2

    @pl.when(j == 0)
    def _():
        acc_ref[...] = jnp.zeros_like(acc_ref)

    # h tile (f32 bias + tanh):  tanh(x @ W1[:, j] + b1[j])
    h = jnp.dot(x_ref[...], w1_ref[...], preferred_element_type=jnp.float32)
    h = jnp.tanh(h + b1_ref[...].astype(jnp.float32))

    # partial second matmul:  acc += h_tile @ W2[j, :]
    # (h rounded to the W2 dtype for the MXU fast path; acc stays f32)
    acc_ref[...] += jnp.dot(h.astype(w2_ref.dtype), w2_ref[...],
                            preferred_element_type=jnp.float32)

    @pl.when(j == pl.num_programs(1) - 1)
    def _():
        o_ref[...] = (acc_ref[...] + b2_ref[...].astype(jnp.float32)).astype(o_ref.dtype)


def _mlp_project(emb, w1, b1, w2, b2, compute_dtype):
    """(tanh(E @ W1 + b1)) @ W2 + b2 over the (padded) embedding table, fused."""
    P, kv = emb.shape
    hidden = w1.shape[1]
    out_dtype = emb.dtype

    in_dtype = compute_dtype if compute_dtype is not None else emb.dtype
    in_bytes = jnp.dtype(in_dtype).itemsize
    out_bytes = jnp.dtype(out_dtype).itemsize

    # Row tile: multiple of 16 for bf16 (native (16,128) packing), 8 for f32.
    row_mult = 16 if in_bytes < 4 else 8
    tm = 256 if P > 256 else _round_up(P, row_mult)
    P_pad = _round_up(P, tm)

    # Generation-aware hidden-tile cap from the VMEM budget:
    #   resident:  x (tm,kv), out (tm,kv), f32 acc (tm,kv), b2
    #   streamed (double-buffered per hidden column): W1 (kv,tn), W2 (tn,kv), b1
    vmem_cap = _vmem_capacity_bytes()
    budget = min(int(vmem_cap * 0.7), 100 * 1024 * 1024)
    fixed = tm * kv * (2 * in_bytes + 2 * out_bytes + 4) + 2 * kv * 4
    per_col = 4 * kv * in_bytes + 8
    tn_cap = max(128, (budget - fixed) // per_col)
    tn = _pick_tile(hidden, min(tn_cap, 2048))

    x = emb
    if P_pad != P:
        x = jnp.pad(x, ((0, P_pad - P), (0, 0)))
    if compute_dtype is not None:
        x = x.astype(compute_dtype)
        w1 = w1.astype(compute_dtype)
        w2 = w2.astype(compute_dtype)
    b1 = b1.reshape(1, hidden).astype(jnp.float32)
    b2 = b2.reshape(1, kv).astype(jnp.float32)

    grid = (P_pad // tm, hidden // tn)
    vmem_limit = min(int(vmem_cap * 0.8), 110 * 1024 * 1024)

    return pl.pallas_call(
        _fused_mlp_kernel,
        out_shape=jax.ShapeDtypeStruct((P_pad, kv), out_dtype),
        grid_spec=pltpu.PrefetchScalarGridSpec(
            num_scalar_prefetch=0,
            grid=grid,
            in_specs=[
                pl.BlockSpec((tm, kv), lambda i, j: (i, 0)),   # x: full-K, resident per M tile
                pl.BlockSpec((kv, tn), lambda i, j: (0, j)),   # W1: streamed over hidden
                pl.BlockSpec((1, tn),  lambda i, j: (0, j)),   # b1
                pl.BlockSpec((tn, kv), lambda i, j: (j, 0)),   # W2: streamed over hidden
                pl.BlockSpec((1, kv),  lambda i, j: (0, 0)),   # b2: resident
            ],
            out_specs=pl.BlockSpec((tm, kv), lambda i, j: (i, 0)),  # resident accumulatee
            scratch_shapes=[pltpu.VMEM((tm, kv), jnp.float32)],
        ),
        compiler_params=pltpu.CompilerParams(
            dimension_semantics=("parallel", "arbitrary"),
            vmem_limit_bytes=vmem_limit,
        ),
    )(x, w1, b1, w2, b2)  # (P_pad, kv); padded rows are never gathered


# --------------------- row gather from a VMEM-resident table ---------------- #
def _gather_kernel(idx_ref, table_ref, out_ref, *, tm):
    base = pl.program_id(0) * tm

    @pl.loop(0, tm)
    def _(r):
        row = idx_ref[base + r]
        out_ref[pl.ds(r, 1), :] = table_ref[pl.ds(row, 1), :]


def _gather_rows(table, idx, *, tm_cap=32):
    """out[r] = table[idx[r]]; the whole table stays resident in VMEM."""
    n_rows = idx.shape[0]
    P, kv = table.shape
    tm = tm_cap if n_rows > tm_cap else _round_up(n_rows, 8)
    n_pad = _round_up(n_rows, tm)
    if n_pad != n_rows:
        idx = jnp.pad(idx, (0, n_pad - n_rows))  # padded entries read row 0 (valid)

    kernel = functools.partial(_gather_kernel, tm=tm)
    out = pl.pallas_call(
        kernel,
        out_shape=jax.ShapeDtypeStruct((n_pad, kv), table.dtype),
        grid_spec=pltpu.PrefetchScalarGridSpec(
            num_scalar_prefetch=1,
            grid=(n_pad // tm,),
            # Constant block index => table is DMA'd to VMEM once and stays resident.
            in_specs=[pl.BlockSpec((P, kv), lambda i, idx: (0, 0))],
            out_specs=pl.BlockSpec((tm, kv), lambda i, idx: (i, 0)),
        ),
        compiler_params=pltpu.CompilerParams(
            dimension_semantics=("arbitrary",),
        ),
    )(idx, table)
    return out[:n_rows]


# ------------------------------ wrapper ------------------------------------- #
def _prefix_is_arange(prefix):
    """True iff prefix[b] == arange(L) for every batch row (standard PrefixEncoder
    usage).  Only detected for concrete (non-traced) inputs; otherwise False."""
    try:
        p = np.asarray(prefix)
    except Exception:
        return False
    if p.ndim != 2:
        return False
    return bool((p == np.arange(p.shape[1], dtype=p.dtype)[None, :]).all())


def prefix_encoder_forward(prefix, params, *, prefix_projection,
                           compute_dtype=jnp.bfloat16):
    """prefix: int array (B, L) of prefix token indices in [0, pre_seq_len).

    compute_dtype: dtype for x / W1 / W2 / h on the MXU (default bf16; f32
    accumulation and f32 bias/tanh always).  None => keep embedding dtype.
    """
    B, L = prefix.shape
    emb = params["embedding"]                     # (pre_seq_len, kv_size)
    P, kv_size = emb.shape
    idx = prefix.reshape(-1).astype(jnp.int32)    # (B*L,)

    if prefix_projection:
        table = _mlp_project(
            emb, params["w1"], params["b1"], params["w2"], params["b2"],
            compute_dtype,
        )
    else:
        table = emb

    if L <= P and _prefix_is_arange(prefix):
        # Standard usage: identical arange indices per batch row -> broadcast.
        return jnp.broadcast_to(table[:L][None, :, :], (B, L, kv_size))

    out = _gather_rows(table, idx)                # (B*L, kv_size)
    return out.reshape(B, L, kv_size)


# ------------------------------ reference ----------------------------------- #
def _reference(prefix, params, *, prefix_projection):
    idx = prefix.reshape(-1)
    x = jnp.take(params["embedding"], idx, axis=0)
    if prefix_projection:
        h = jnp.tanh(x @ params["w1"] + params["b1"])
        x = h @ params["w2"] + params["b2"]
    return x.reshape(prefix.shape + (params["embedding"].shape[1],))


def _make_params(key, pre_seq_len, kv_size, hidden_size):
    k_emb, k_w1, k_b1, k_w2, k_b2 = jax.random.split(key, 5)
    return {
        "embedding": jax.random.normal(k_emb, (pre_seq_len, kv_size), jnp.float32) * 0.02,
        "w1": jax.random.normal(k_w1, (kv_size, hidden_size), jnp.float32) * 0.05,
        "b1": jax.random.normal(k_b1, (hidden_size,), jnp.float32) * 0.01,
        "w2": jax.random.normal(k_w2, (hidden_size, kv_size), jnp.float32) * 0.05,
        "b2": jax.random.normal(k_b2, (kv_size,), jnp.float32) * 0.01,
    }


# -------------------------------- main --------------------------------------- #
if __name__ == "__main__":
    # Small synthetic ChatGLMConfig:
    #   num_layers=2, kv_channels=32, multi_query_group_num=1 -> kv_size = 128
    #   hidden_size=64, pre_seq_len=8, batch=2, prefix_len=8
    num_layers, kv_channels, mqg = 2, 32, 1
    kv_size = num_layers * kv_channels * mqg * 2          # 128
    hidden_size = 64
    pre_seq_len = 8
    batch, prefix_len = 2, 8

    key = jax.random.PRNGKey(0)
    k_params, k_idx, k_params2, k_idx2 = jax.random.split(key, 4)

    params = _make_params(k_params, pre_seq_len, kv_size, hidden_size)
    prefix = jax.random.randint(k_idx, (batch, prefix_len), 0, pre_seq_len, jnp.int32)

    # --- prefix_projection=True, full-f32 path (bit-accurate check) ---
    out_f32 = jax.block_until_ready(
        prefix_encoder_forward(prefix, params, prefix_projection=True,
                               compute_dtype=None))
    ref_proj = _reference(prefix, params, prefix_projection=True)
    assert out_f32.shape == (batch, prefix_len, kv_size)
    assert jnp.allclose(out_f32, ref_proj, atol=1e-5, rtol=1e-5)

    # --- prefix_projection=True, default bf16 MXU inputs (f32 accumulate) ---
    out_bf16 = jax.block_until_ready(
        prefix_encoder_forward(prefix, params, prefix_projection=True))
    assert jnp.allclose(out_bf16, ref_proj, atol=5e-3, rtol=5e-2)

    # --- prefix_projection=False (embedding lookup only, gather kernel) ---
    out_emb = jax.block_until_ready(
        prefix_encoder_forward(prefix, params, prefix_projection=False))
    ref_emb = _reference(prefix, params, prefix_projection=False)
    assert out_emb.shape == (batch, prefix_len, kv_size)
    assert jnp.allclose(out_emb, ref_emb, atol=1e-6, rtol=1e-6)

    # --- standard usage: prefix == arange(pre_seq_len) per batch (fast path) ---
    prefix_ar = jnp.broadcast_to(
        jnp.arange(prefix_len, dtype=jnp.int32)[None, :], (batch, prefix_len))
    out_ar = jax.block_until_ready(
        prefix_encoder_forward(prefix_ar, params, prefix_projection=True,
                               compute_dtype=None))
    assert jnp.allclose(out_ar, _reference(prefix_ar, params, prefix_projection=True),
                        atol=1e-5, rtol=1e-5)

    # --- non-aligned shapes to exercise row padding (pre_seq_len=7, len=5) ---
    params2 = _make_params(k_params2, 7, kv_size, hidden_size)
    prefix2 = jax.random.randint(k_idx2, (3, 5), 0, 7, jnp.int32)

    out2_proj = jax.block_until_ready(
        prefix_encoder_forward(prefix2, params2, prefix_projection=True,
                               compute_dtype=None))
    assert jnp.allclose(out2_proj, _reference(prefix2, params2, prefix_projection=True),
                        atol=1e-5, rtol=1e-5)

    out2_emb = jax.block_until_ready(
        prefix_encoder_forward(prefix2, params2, prefix_projection=False))
    assert jnp.allclose(out2_emb, _reference(prefix2, params2, prefix_projection=False),
                        atol=1e-6, rtol=1e-6)

    print("KERNEL_OK")
</pallas_src>

<mosaic_0001>
module attributes {stable_mosaic.version = 11 : i64} {
  func.func @_fused_mlp_kernel(%arg0: i32, %arg1: i32, %arg2: memref<8x128xf32, #tpu.memory_space<vmem>>, %arg3: memref<128x64xf32, #tpu.memory_space<vmem>>, %arg4: memref<1x64xf32, #tpu.memory_space<vmem>>, %arg5: memref<64x128xf32, #tpu.memory_space<vmem>>, %arg6: memref<1x128xf32, #tpu.memory_space<vmem>>, %arg7: memref<8x128xf32, #tpu.memory_space<vmem>>, %arg8: memref<8x128xf32, #tpu.memory_space<vmem>>) attributes {dimension_semantics = [#tpu.dimension_semantics<parallel>, #tpu.dimension_semantics<arbitrary>], iteration_bounds = array<i64: 1, 1>, scalar_prefetch = 0 : i64, scratch_operands = 1 : i64, tpu.core_type = #tpu.core_type<tc>, window_params = [{transform_indices = @transform_0, window_bounds = array<i64: 8, 128>}, {transform_indices = @transform_1, window_bounds = array<i64: 128, 64>}, {transform_indices = @transform_2, window_bounds = array<i64: 1, 64>}, {transform_indices = @transform_3, window_bounds = array<i64: 64, 128>}, {pipeline_mode = #tpu.pipeline_mode<synchronous>, transform_indices = @transform_4, window_bounds = array<i64: 1, 128>}, {transform_indices = @transform_5, window_bounds = array<i64: 8, 128>}]} {
    %c0_i32 = arith.constant 0 : i32
    %0 = arith.cmpi eq, %arg1, %c0_i32 : i32
    %1 = arith.extui %0 : i1 to i32
    %c0_i32_0 = arith.constant 0 : i32
    %2 = arith.cmpi ne, %1, %c0_i32_0 : i32
    scf.if %2 {
      %cst_15 = arith.constant 0.000000e+00 : f32
      %18 = vector.broadcast %cst_15 : f32 to vector<8x128xf32>
      %c0_16 = arith.constant 0 : index
      %c0_17 = arith.constant 0 : index
      %19 = vector.load %arg8[%c0_16, %c0_17] : memref<8x128xf32, #tpu.memory_space<vmem>>, vector<8x128xf32>
      tpu.vector_store %arg8[%c0_16, %c0_17], %18 {strides = array<i32>} : memref<8x128xf32, #tpu.memory_space<vmem>>, vector<8x128xf32>,
    } else {
    }
    %c0 = arith.constant 0 : index
    %c0_1 = arith.constant 0 : index
    %3 = vector.load %arg2[%c0, %c0_1] : memref<8x128xf32, #tpu.memory_space<vmem>>, vector<8x128xf32>
    %c0_2 = arith.constant 0 : index
    %c0_3 = arith.constant 0 : index
    %4 = vector.load %arg3[%c0_2, %c0_3] : memref<128x64xf32, #tpu.memory_space<vmem>>, vector<128x64xf32>
    %cst = arith.constant dense<0.000000e+00> : vector<8x64xf32>
    %5 = tpu.matmul %3, %4, %cst {dimension_numbers = #tpu.dot_dimension_numbers<[1], [0], [0], [1], [0, 0, 1, 1], [], []>} : vector<8x128xf32>, vector<128x64xf32>, vector<8x64xf32> -> vector<8x64xf32>
    %c0_4 = arith.constant 0 : index
    %c0_5 = arith.constant 0 : index
    %6 = vector.load %arg4[%c0_4, %c0_5] : memref<1x64xf32, #tpu.memory_space<vmem>>, vector<1x64xf32>
    %7 = vector.broadcast %6 : vector<1x64xf32> to vector<8x64xf32>
    %8 = arith.addf %5, %7 : vector<8x64xf32>
    %9 = math.tanh %8 : vector<8x64xf32>
    %c0_6 = arith.constant 0 : index
    %c0_7 = arith.constant 0 : index
    %10 = vector.load %arg8[%c0_6, %c0_7] : memref<8x128xf32, #tpu.memory_space<vmem>>, vector<8x128xf32>
    %c0_8 = arith.constant 0 : index
    %c0_9 = arith.constant 0 : index
    %11 = vector.load %arg5[%c0_8, %c0_9] : memref<64x128xf32, #tpu.memory_space<vmem>>, vector<64x128xf32>
    %cst_10 = arith.constant dense<0.000000e+00> : vector<8x128xf32>
    %12 = tpu.matmul %9, %11, %cst_10 {dimension_numbers = #tpu.dot_dimension_numbers<[1], [0], [0], [1], [0, 0, 1, 1], [], []>} : vector<8x64xf32>, vector<64x128xf32>, vector<8x128xf32> -> vector<8x128xf32>
    %13 = arith.addf %10, %12 : vector<8x128xf32>
    %c0_11 = arith.constant 0 : index
    %c0_12 = arith.constant 0 : index
    %14 = vector.load %arg8[%c0_11, %c0_12] : memref<8x128xf32, #tpu.memory_space<vmem>>, vector<8x128xf32>
    tpu.vector_store %arg8[%c0_11, %c0_12], %13 {strides = array<i32>} : memref<8x128xf32, #tpu.memory_space<vmem>>, vector<8x128xf32>,
    %c0_i32_13 = arith.constant 0 : i32
    %15 = arith.cmpi eq, %arg1, %c0_i32_13 : i32
    %16 = arith.extui %15 : i1 to i32
    %c0_i32_14 = arith.constant 0 : i32
    %17 = arith.cmpi ne, %16, %c0_i32_14 : i32
    scf.if %17 {
      %c0_15 = arith.constant 0 : index
      %c0_16 = arith.constant 0 : index
      %18 = vector.load %arg8[%c0_15, %c0_16] : memref<8x128xf32, #tpu.memory_space<vmem>>, vector<8x128xf32>
      %c0_17 = arith.constant 0 : index
      %c0_18 = arith.constant 0 : index
      %19 = vector.load %arg6[%c0_17, %c0_18] : memref<1x128xf32, #tpu.memory_space<vmem>>, vector<1x128xf32>
      %20 = vector.broadcast %19 : vector<1x128xf32> to vector<8x128xf32>
      %21 = arith.addf %18, %20 : vector<8x128xf32>
      %c0_19 = arith.constant 0 : index
      %c0_20 = arith.constant 0 : index
      %22 = vector.load %arg7[%c0_19, %c0_20] : memref<8x128xf32, #tpu.memory_space<vmem>>, vector<8x128xf32>
      tpu.vector_store %arg7[%c0_19, %c0_20], %21 {strides = array<i32>} : memref<8x128xf32, #tpu.memory_space<vmem>>, vector<8x128xf32>,
    } else {
    }
    return
  }
  func.func @transform_0(%arg0: i32, %arg1: i32) -> (i32, i32) {
    %c0_i32 = arith.constant 0 : i32
    %c0_i32_0 = arith.constant 0 : i32
    return %arg0, %c0_i32 : i32, i32
  }
  func.func @transform_1(%arg0: i32, %arg1: i32) -> (i32, i32) {
    %c0_i32 = arith.constant 0 : i32
    %c0_i32_0 = arith.constant 0 : i32
    return %c0_i32, %arg1 : i32, i32
  }
  func.func @transform_2(%arg0: i32, %arg1: i32) -> (i32, i32) {
    %c0_i32 = arith.constant 0 : i32
    %c0_i32_0 = arith.constant 0 : i32
    return %c0_i32, %arg1 : i32, i32
  }
  func.func @transform_3(%arg0: i32, %arg1: i32) -> (i32, i32) {
    %c0_i32 = arith.constant 0 : i32
    %c0_i32_0 = arith.constant 0 : i32
    return %arg1, %c0_i32 : i32, i32
  }
  func.func @transform_4(%arg0: i32, %arg1: i32) -> (i32, i32) {
    %c0_i32 = arith.constant 0 : i32
    %c0_i32_0 = arith.constant 0 : i32
    %c0_i32_1 = arith.constant 0 : i32
    return %c0_i32, %c0_i32_0 : i32, i32
  }
  func.func @transform_5(%arg0: i32, %arg1: i32) -> (i32, i32) {
    %c0_i32 = arith.constant 0 : i32
    %c0_i32_0 = arith.constant 0 : i32
    return %arg0, %c0_i32 : i32, i32
  }
}

</mosaic_0001>

<llo_original>
// kernel: tpu_custom_call.1
$region0: #{tpu_custom_call.1}
  #allocation0 [shape = 'u32[]', space=smem, size = 0x4, offset = 0x4, fixed_abs, tag = 'smem constant byte address 0x4 - core index']
  #allocation1 [shape = 'u32[144,128]{1,0:T(1,128)}', space=vmem, size = 0x12000, scoped, tag = 'internal scratch']
  #allocation2 [shape = 'f32[8,128]{1,0:T(8,128)}', space=vmem, size = 0x1000, scoped, tag = 'scratch operand']
  %s0 = inlined_call_operand.vmem [shape: f32[8,128], index: 0, kind: input, shape index: {}]
  %s1 = inlined_call_operand.vmem [shape: f32[128,64], index: 1, kind: input, shape index: {}]
  %s2 = inlined_call_operand.vmem [shape: f32[1,64], index: 2, kind: input, shape index: {}]
  %s3 = inlined_call_operand.vmem [shape: f32[64,128], index: 3, kind: input, shape index: {}]
  %s4 = inlined_call_operand.vmem [shape: f32[1,128], index: 4, kind: input, shape index: {}]
  %s5 = inlined_call_operand.hbm [shape: f32[8,128], index: 5, kind: output, shape index: {}]
  %s6 = sld [smem:[#allocation0]]
  $region38: #{tpu_custom_call.1} parent=0
    _
  %s8 = ssub.s32 1, %s6
  %s9 = scalar_select 0, %s8, %s6
  $region1: #{tpu_custom_call.1} parent=0
    #allocation3 [shape = 'u8[4096]{0}', space=vmem, size = 0x1000, scoped, tag = 'output window, operand 0, single buffered']
    #allocation4 [shape = 's32[1]{0}', space=sflag, size = 0x4, scoped, tag = 'scoped memory for tpu_custom_call.1']
    %10 = vsyncpa [#allocation4], 0
    // Predicated region
    $region2: #{tpu_custom_call.1} parent=1 // pred_check
      _
    $region3: #{tpu_custom_call.1} parent=1 // pred_check_branch
      %12 = sbr.rel (0) target = $region5
    $region4: #{tpu_custom_call.1} parent=1 // pred_region
      _
    $region5: #{tpu_custom_call.1} parent=1 // pred_fallthru
      _
    // Predicated region
    $region6: #{tpu_custom_call.1} parent=1 // pred_check
      _
    $region7: #{tpu_custom_call.1} parent=1 // pred_check_branch
      %14 = sbr.rel (0) target = $region9
    $region8: #{tpu_custom_call.1} parent=1 // pred_region
      _
    $region9: #{tpu_custom_call.1} parent=1 // pred_fallthru
      _
    // Predicated region
    $region10: #{tpu_custom_call.1} parent=1 // pred_check
      _
    $region11: #{tpu_custom_call.1} parent=1 // pred_check_branch
      %16 = sbr.rel (0) target = $region13
    $region12: #{tpu_custom_call.1} parent=1 // pred_region
      _
    $region13: #{tpu_custom_call.1} parent=1 // pred_fallthru
      _
    // Predicated region
    $region14: #{tpu_custom_call.1} parent=1 // pred_check
      _
    $region15: #{tpu_custom_call.1} parent=1 // pred_check_branch
      %18 = sbr.rel (0) target = $region17
    $region16: #{tpu_custom_call.1} parent=1 // pred_region
      _
    $region17: #{tpu_custom_call.1} parent=1 // pred_fallthru
      _
    // Predicated region
    $region18: #{tpu_custom_call.1} parent=1 // pred_check
      _
    $region19: #{tpu_custom_call.1} parent=1 // pred_check_branch
      %20 = sbr.rel (0) target = $region21
    $region20: #{tpu_custom_call.1} parent=1 // pred_region
      _
    $region21: #{tpu_custom_call.1} parent=1 // pred_fallthru
      _
    %p21 = scmp.eq.s32.totalorder 0, 0
    // Predicated region
    $region22: #{tpu_custom_call.1} parent=1 // pred_check
      %p22 = pneg %p21
    $region23: #{tpu_custom_call.1} parent=1 // pred_check_branch
      %24 = sbr.rel (%p22) target = $region25
    $region24: #{tpu_custom_call.1} parent=1 // pred_region
      %25 = vst [vmem:[#allocation2] sm:$0xff] 0.0
    $region25: #{tpu_custom_call.1} parent=1 // pred_fallthru
      _
    %v26 = vld [vmem:[%s0] sm:$0xff]
    %v27 = vld [vmem:[%s1] sm:$0xff]
    %v28 = vld [vmem:[%s1 + $0x8] sm:$0xff]
    %v29 = vld [vmem:[%s1 + $0x10] sm:$0xff]
    %v30 = vld [vmem:[%s1 + $0x18] sm:$0xff]
    %v31 = vld [vmem:[%s1 + $0x20] sm:$0xff]
    %v32 = vld [vmem:[%s1 + $0x28] sm:$0xff]
    %v33 = vld [vmem:[%s1 + $0x30] sm:$0xff]
    %v34 = vld [vmem:[%s1 + $0x38] sm:$0xff]
    %v35 = vld [vmem:[%s1 + $0x40] sm:$0xff]
    %v36 = vld [vmem:[%s1 + $0x48] sm:$0xff]
    %v37 = vld [vmem:[%s1 + $0x50] sm:$0xff]
    %v38 = vld [vmem:[%s1 + $0x58] sm:$0xff]
    %v39 = vld [vmem:[%s1 + $0x60] sm:$0xff]
    %v40 = vld [vmem:[%s1 + $0x68] sm:$0xff]
    %v41 = vld [vmem:[%s1 + $0x70] sm:$0xff]
    %v42 = vld [vmem:[%s1 + $0x78] sm:$0xff]
    %v43 = vld [vmem:[%s2] sm:$0x1]
    %v45 = vlaneseq
    %v46 = vshrl.u32 %v45, 7
    %v47 = vsub.s32 0, %v46
    %v48 = vrot.slane %v43, %v47
    %50 = vmatprep.subr.mxu0 0.0
    %51 = vmatpush1.msra.mxu0 %v27
    %52 = vmatprep.subr.mxu0 0.0
    %53 = vmatpush1.msra.mxu0 %v28
    %54 = vmatprep.subr.mxu0 0.0
    %55 = vmatpush1.msra.mxu0 %v29
    %56 = vmatprep.subr.mxu0 0.0
    %57 = vmatpush1.msra.mxu0 %v30
    %58 = vmatprep.subr.mxu0 0.0
    %59 = vmatpush1.msra.mxu0 %v31
    %60 = vmatprep.subr.mxu0 0.0
    %61 = vmatpush1.msra.mxu0 %v32
    %62 = vmatprep.subr.mxu0 0.0
    %63 = vmatpush1.msra.mxu0 %v33
    %64 = vmatprep.subr.mxu0 0.0
    %65 = vmatpush1.msra.mxu0 %v34
    %66 = vmatprep.subr.mxu0 0.0
    %67 = vmatpush1.msra.mxu0 %v35
    %68 = vmatprep.subr.mxu0 0.0
    %69 = vmatpush1.msra.mxu0 %v36
    %70 = vmatprep.subr.mxu0 0.0
    %71 = vmatpush1.msra.mxu0 %v37
    %72 = vmatprep.subr.mxu0 0.0
    %73 = vmatpush1.msra.mxu0 %v38
    %74 = vmatprep.subr.mxu0 0.0
    %75 = vmatpush1.msra.mxu0 %v39
    %76 = vmatprep.subr.mxu0 0.0
    %77 = vmatpush1.msra.mxu0 %v40
    %78 = vmatprep.subr.mxu0 0.0
    %79 = vmatpush1.msra.mxu0 %v41
    %80 = vmatprep.subr.mxu0 0.0
    %81 = vmatpush1.msra.mxu0 %v42
    %82 = vmatprep.subr.mxu0 0.0
    %83 = vmatpush1.msra.mxu0 0.0
    %84 = vmatprep.subr.mxu0 0.0
    %85 = vmatpush1.msra.mxu0 0.0
    %86 = vmatprep.subr.mxu0 0.0
    %87 = vmatpush1.msra.mxu0 0.0
    %88 = vmatprep.subr.mxu0 0.0
    %89 = vmatpush1.msra.mxu0 0.0
    %90 = vmatprep.subr.mxu0 0.0
    %91 = vmatpush1.msra.mxu0 0.0
    %92 = vmatprep.subr.mxu0 0.0
    %93 = vmatpush1.msra.mxu0 0.0
    %94 = vmatprep.subr.mxu0 0.0
    %95 = vmatpush1.msra.mxu0 0.0
    %96 = vmatprep.subr.mxu0 0.0
    %97 = vmatpush1.msra.mxu0 0.0
    %98 = vmatprep.subr.mxu0 0.0
    %99 = vmatpush1.msra.mxu0 0.0
    %100 = vmatprep.subr.mxu0 0.0
    %101 = vmatpush1.msra.mxu0 0.0
    %102 = vmatprep.subr.mxu0 0.0
    %103 = vmatpush1.msra.mxu0 0.0
    %104 = vmatprep.subr.mxu0 0.0
    %105 = vmatpush1.msra.mxu0 0.0
    %106 = vmatprep.subr.mxu0 0.0
    %107 = vmatpush1.msra.mxu0 0.0
    %108 = vmatprep.subr.mxu0 0.0
    %109 = vmatpush1.msra.mxu0 0.0
    %110 = vmatprep.subr.mxu0 0.0
    %111 = vmatpush1.msra.mxu0 0.0
    %112 = vmatprep.subr.mxu0 0.0
    %113 = vmatpush1.msra.mxu0 0.0
    %114 = vmatprep.mubr.f32.mxu0 0.0
    %115 = vmatmul.mubr.f32.gmra.mrb[0].mxu0 %v26
    %v116 = vpop.f32.mrb[0].mxu0
    %v117 = vadd.f32 %v48, %v116
    %v118 = vpop.f32.mrb[0].mxu0
    %119 = vdwg.mxu0
    %v120 = vtanh.pop %v117
    %v121 = vld [vmem:[#allocation2] sm:$0xff]
    %v122 = vld [vmem:[%s3] sm:$0xff]
    %v123 = vld [vmem:[%s3 + $0x8] sm:$0xff]
    %v124 = vld [vmem:[%s3 + $0x10] sm:$0xff]
    %v125 = vld [vmem:[%s3 + $0x18] sm:$0xff]
    %v126 = vld [vmem:[%s3 + $0x20] sm:$0xff]
    %v127 = vld [vmem:[%s3 + $0x28] sm:$0xff]
    %v128 = vld [vmem:[%s3 + $0x30] sm:$0xff]
    %v129 = vld [vmem:[%s3 + $0x38] sm:$0xff]
    %vm130 = vcmask 523264
    %v132 = vsel %vm130, %v120, 0
    %134 = vmatprep.subr.mxu0 0.0
    %135 = vmatpush1.msra.mxu0 %v122
    %136 = vmatprep.subr.mxu0 0.0
    %137 = vmatpush1.msra.mxu0 %v123
    %138 = vmatprep.subr.mxu0 0.0
    %139 = vmatpush1.msra.mxu0 %v124
    %140 = vmatprep.subr.mxu0 0.0
    %141 = vmatpush1.msra.mxu0 %v125
    %142 = vmatprep.subr.mxu0 0.0
    %143 = vmatpush1.msra.mxu0 %v126
    %144 = vmatprep.subr.mxu0 0.0
    %145 = vmatpush1.msra.mxu0 %v127
    %146 = vmatprep.subr.mxu0 0.0
    %147 = vmatpush1.msra.mxu0 %v128
    %148 = vmatprep.subr.mxu0 0.0
    %149 = vmatpush1.msra.mxu0 %v129
    %150 = vmatprep.subr.mxu0 0.0
    %151 = vmatpush1.msra.mxu0 0.0
    %152 = vmatprep.subr.mxu0 0.0
    %153 = vmatpush1.msra.mxu0 0.0
    %154 = vmatprep.subr.mxu0 0.0
    %155 = vmatpush1.msra.mxu0 0.0
    %156 = vmatprep.subr.mxu0 0.0
    %157 = vmatpush1.msra.mxu0 0.0
    %158 = vmatprep.subr.mxu0 0.0
    %159 = vmatpush1.msra.mxu0 0.0
    %160 = vmatprep.subr.mxu0 0.0
    %161 = vmatpush1.msra.mxu0 0.0
    %162 = vmatprep.subr.mxu0 0.0
    %163 = vmatpush1.msra.mxu0 0.0
    %164 = vmatprep.subr.mxu0 0.0
    %165 = vmatpush1.msra.mxu0 0.0
    %166 = vmatprep.subr.mxu0 0.0
    %167 = vmatpush1.msra.mxu0 0.0
    %168 = vmatprep.subr.mxu0 0.0
    %169 = vmatpush1.msra.mxu0 0.0
    %170 = vmatprep.subr.mxu0 0.0
    %171 = vmatpush1.msra.mxu0 0.0
    %172 = vmatprep.subr.mxu0 0.0
    %173 = vmatpush1.msra.mxu0 0.0
    %174 = vmatprep.subr.mxu0 0.0
    %175 = vmatpush1.msra.mxu0 0.0
    %176 = vmatprep.subr.mxu0 0.0
    %177 = vmatpush1.msra.mxu0 0.0
    %178 = vmatprep.subr.mxu0 0.0
    %179 = vmatpush1.msra.mxu0 0.0
    %180 = vmatprep.subr.mxu0 0.0
    %181 = vmatpush1.msra.mxu0 0.0
    %182 = vmatprep.subr.mxu0 0.0
    %183 = vmatpush1.msra.mxu0 0.0
    %184 = vmatprep.subr.mxu0 0.0
    %185 = vmatpush1.msra.mxu0 0.0
    %186 = vmatprep.subr.mxu0 0.0
    %187 = vmatpush1.msra.mxu0 0.0
    %188 = vmatprep.subr.mxu0 0.0
    %189 = vmatpush1.msra.mxu0 0.0
    %190 = vmatprep.subr.mxu0 0.0
    %191 = vmatpush1.msra.mxu0 0.0
    %192 = vmatprep.subr.mxu0 0.0
    %193 = vmatpush1.msra.mxu0 0.0
    %194 = vmatprep.subr.mxu0 0.0
    %195 = vmatpush1.msra.mxu0 0.0
    %196 = vmatprep.subr.mxu0 0.0
    %197 = vmatpush1.msra.mxu0 0.0
    %198 = vmatprep.mubr.f32.mxu0 0.0
    %199 = vmatmul.mubr.f32.gmra.mrb[0].mxu0 %v132
    %v200 = vpop.f32.mrb[0].mxu0
    %v201 = vadd.f32 0.0, %v200
    %v202 = vpop.f32.mrb[0].mxu0
    %203 = vdwg.mxu0
    %v204 = vadd.f32 %v121, %v201
    %205 = vst [vmem:[#allocation2] sm:$0xff] %v204
    // Predicated region
    $region26: #{tpu_custom_call.1} parent=1 // pred_check
      %p206 = pneg %p21
    $region27: #{tpu_custom_call.1} parent=1 // pred_check_branch
      %208 = sbr.rel (%p206) target = $region29
    $region28: #{tpu_custom_call.1} parent=1 // pred_region
      %v209 = vld [vmem:[#allocation2] sm:$0xff]
      %v210 = vld [vmem:[%s4] sm:$0x1]
      %v212 = vlaneseq
      %v213 = vshrl.u32 %v212, 7
      %v214 = vsub.s32 0, %v213
      %v215 = vrot.slane %v210, %v214
      %v217 = vadd.f32 %v209, %v215
      %218 = vst [vmem:[#allocation3] sm:$0xff] %v217
    $region29: #{tpu_custom_call.1} parent=1 // pred_fallthru
      _
    // Predicated region
    $region30: #{tpu_custom_call.1} parent=1 // pred_check
      _
    $region31: #{tpu_custom_call.1} parent=1 // pred_check_branch
      %220 = sbr.rel (0) target = $region33
    $region32: #{tpu_custom_call.1} parent=1 // pred_region
      %s222 = ssub.s32 128, 128
      %223 = vsyncadd [#allocation4], %s222
      %s225 = sshll.u32 [#allocation3], 4
      %s226 = int_to_ptr.vmem [resolvable:$true] %s225
      %228 = dma.vmem_to_hbm [thread:$0]  %s226, 128, %s5, [#allocation4]
    $region33: #{tpu_custom_call.1} parent=1 // pred_fallthru
      _
    // Predicated region
    $region34: #{tpu_custom_call.1} parent=1 // pred_check
      _
    $region35: #{tpu_custom_call.1} parent=1 // pred_check_branch
      %230 = sbr.rel (0) target = $region37
    $region36: #{tpu_custom_call.1} parent=1 // pred_region
      %231 = dma.done [#allocation4], 128
    $region37: #{tpu_custom_call.1} parent=1 // pred_fallthru
      _
    %232 = vsyncpa [#allocation4], 1

</llo_original>
